<compile_context>
chip_gen: v7x
topology: tpu7x:2x2x1
jax: 0.10.0
libtpu: 0.0.40
codegen_flags: <defaults>
</compile_context>

<pallas_src>
from typing import Dict, List

import numpy as np
import jax
import jax.numpy as jnp
from jax.experimental import pallas as pl
from jax.experimental.pallas import tpu as pltpu


OUT_PAD = 128  # lane-dense output width; only the first 4 columns are real.


# ----------------------------- Pallas kernel ------------------------------

def _predictor_kernel(
    idx_ref,        # (1, 1, T_pad)       int32  frame -> mora index (-1 = padding)
    frame_ref,      # (1, T_pad, PF)      bf16   [phoneme one-hot | frame_f0]
    invc_ref,       # (1, M_pad, 1)       f32    1 / max(frames per mora, 1)
    mora_ref,       # (1, M_pad, MF)      bf16   [vowel one-hot | cons one-hot | mora_f0]
    w_frame_ref,    # (PF, H)             bf16   folded: [w_ph @ w1_fr ; w1_ff]
    w_mora_ref,     # (MF, H)             bf16   folded: [w_vw @ w1_vw ; w_cn @ w1_cn ; w1_mf]
    b1_ref,         # (1, H)              f32
    w2_ref,         # (H, OUT_PAD)        f32    (zero beyond column 4)
    b2_ref,         # (1, OUT_PAD)        f32    (zero beyond column 4)
    out_ref,        # (1, M_pad, OUT_PAD) f32
):
    f32 = jnp.float32
    bf16 = jnp.bfloat16
    M_pad = out_ref.shape[1]
    T_pad = idx_ref.shape[-1]

    # Build the frame->mora selection mask in-register from the per-frame
    # mora index row -- no dense (M, T) matrix is ever shipped through HBM.
    idx_row = idx_ref[0]                                            # (1, T_pad)
    row_id = jax.lax.broadcasted_iota(jnp.int32, (M_pad, T_pad), 0)
    mask = jnp.where(row_id == idx_row, 1.0, 0.0).astype(bf16)      # (M_pad, T_pad)

    # One contraction over frames for [phoneme one-hot | f0]; scale the sums
    # to segment means with a VPU broadcast multiply.
    seg = jnp.dot(mask, frame_ref[0], preferred_element_type=f32)   # (M_pad, PF)
    seg = seg * invc_ref[0]

    # First linear layer: one frame-side and one mora-side matmul against the
    # folded weights, plus bias (embeddings folded offline).
    h = (
        jnp.dot(seg.astype(bf16), w_frame_ref[...], preferred_element_type=f32)
        + jnp.dot(mora_ref[0], w_mora_ref[...], preferred_element_type=f32)
        + b1_ref[...]
    )                                                               # (M_pad, H)
    h = jnp.maximum(h, 0.0)

    out = jnp.dot(h, w2_ref[...], preferred_element_type=f32) + b2_ref[...]
    out_ref[0] = out.astype(out_ref.dtype)                          # (M_pad, OUT_PAD)


def predictor_inference_pallas(
    idx,         # (B, 1, T_pad)  int32
    frame_feat,  # (B, T_pad, PF) bf16
    inv_cnt,     # (B, M_pad, 1)  f32
    mora_feat,   # (B, M_pad, MF) bf16
    folded: Dict[str, jnp.ndarray],
):
    B, _, T_pad = idx.shape
    PF = frame_feat.shape[-1]
    M_pad = inv_cnt.shape[1]
    MF = mora_feat.shape[-1]
    H = folded["b1"].shape[-1]

    def batched(shape):
        return pl.BlockSpec((1,) + shape, lambda g: (g, 0, 0))

    def shared(shape):
        return pl.BlockSpec(shape, lambda g: (0, 0))

    grid_spec = pltpu.PrefetchScalarGridSpec(
        num_scalar_prefetch=0,
        grid=(B,),
        in_specs=[
            batched((1, T_pad)),
            batched((T_pad, PF)),
            batched((M_pad, 1)),
            batched((M_pad, MF)),
            shared((PF, H)),
            shared((MF, H)),
            shared((1, H)),
            shared((H, OUT_PAD)),
            shared((1, OUT_PAD)),
        ],
        out_specs=pl.BlockSpec((1, M_pad, OUT_PAD), lambda g: (g, 0, 0)),
    )

    # Generation-aware VMEM sizing: double-buffered per-item blocks + shared
    # weights + in-kernel mask/seg/h temporaries, with 2x headroom, clamped so
    # it never exceeds v7x's 64 MiB/TC nor drops below v5e's 16 MiB default.
    per_item = (T_pad * 4 + T_pad * PF * 2 + M_pad * 4 + M_pad * MF * 2
                + M_pad * OUT_PAD * 4)
    weights = PF * H * 2 + MF * H * 2 + H * 4 + H * OUT_PAD * 4 + OUT_PAD * 4
    temps = M_pad * T_pad * 2 + M_pad * (PF + H + OUT_PAD) * 4
    vmem_limit = int(min(48 << 20,
                         max(16 << 20, 2 * (2 * per_item + weights + temps))))
    # TODO(synk): utterances long enough that the in-kernel (M_pad, T_pad)
    # mask exceeds ~24 MiB would need tiling over the frame axis.

    return pl.pallas_call(
        _predictor_kernel,
        out_shape=jax.ShapeDtypeStruct((B, M_pad, OUT_PAD), jnp.float32),
        grid_spec=grid_spec,
        compiler_params=pltpu.CompilerParams(
            dimension_semantics=("parallel",),
            vmem_limit_bytes=vmem_limit),
    )(
        idx, frame_feat, inv_cnt, mora_feat,
        folded["w_frame_h"], folded["w_mora_h"], folded["b1"],
        folded["w2_pad"], folded["b2_pad"],
    )


# Pure-JAX reference mirroring the kernel math (for sanity checking).
def _reference_blocked(idx, frame_feat, inv_cnt, mora_feat, folded):
    f32 = jnp.float32
    bf16 = jnp.bfloat16
    M_pad = inv_cnt.shape[1]
    row_id = jnp.arange(M_pad, dtype=jnp.int32)[None, :, None]       # (1, M, 1)
    mask = jnp.where(row_id == idx, 1.0, 0.0).astype(bf16)           # (B, M, T)
    seg = jnp.einsum("bmt,btp->bmp", mask, frame_feat,
                     preferred_element_type=f32) * inv_cnt
    h = (
        jnp.einsum("bmp,ph->bmh", seg.astype(bf16), folded["w_frame_h"],
                   preferred_element_type=f32)
        + jnp.einsum("bmf,fh->bmh", mora_feat, folded["w_mora_h"],
                     preferred_element_type=f32)
        + folded["b1"][None]
    )
    h = jnp.maximum(h, 0.0)
    return (jnp.einsum("bmh,ho->bmo", h, folded["w2_pad"],
                       preferred_element_type=f32)
            + folded["b2_pad"][None])


# ----------------------------- parameter prep ------------------------------

def init_params(key, phoneme_size, vowel_size, consonant_size, embed=16, hidden=32):
    ks = jax.random.split(key, 11)
    f32 = jnp.float32

    def w(k, shape, scale=0.1):
        return (scale * jax.random.normal(k, shape)).astype(f32)

    return {
        "w_ph": w(ks[0], (phoneme_size, embed)),
        "w_vw": w(ks[1], (vowel_size, embed)),
        "w_cn": w(ks[2], (consonant_size, embed)),
        "w1_fr": w(ks[3], (embed, hidden)),
        "w1_ff": w(ks[4], (1, hidden)),
        "w1_mf": w(ks[5], (1, hidden)),
        "w1_vw": w(ks[6], (embed, hidden)),
        "w1_cn": w(ks[7], (embed, hidden)),
        "b1": w(ks[8], (1, hidden)),
        "w2": w(ks[9], (hidden, 4)),
        "b2": w(ks[10], (1, 4)),
    }


def fold_params(params):
    """Fold embeddings into the first layer, stack feature groups, pad the head."""
    f32 = jnp.float32
    bf16 = jnp.bfloat16
    H = params["w2"].shape[0]

    # Frame-side weight: rows for phoneme one-hot columns, then the frame-f0 column.
    w_frame_h = jnp.concatenate(
        [jnp.dot(params["w_ph"], params["w1_fr"]), params["w1_ff"]],
        axis=0).astype(bf16)                                        # (P+1, H)
    # Mora-side weight: vowel rows, consonant rows, then the mora-f0 column.
    w_mora_h = jnp.concatenate(
        [jnp.dot(params["w_vw"], params["w1_vw"]),
         jnp.dot(params["w_cn"], params["w1_cn"]),
         params["w1_mf"]],
        axis=0).astype(bf16)                                        # (V+C+1, H)

    w2_pad = jnp.zeros((H, OUT_PAD), f32).at[:, :4].set(params["w2"].astype(f32))
    b2_pad = jnp.zeros((1, OUT_PAD), f32).at[:, :4].set(params["b2"].astype(f32))

    return {
        "w_frame_h": w_frame_h,
        "w_mora_h": w_mora_h,
        "b1": params["b1"].astype(f32),
        "w2_pad": w2_pad,
        "b2_pad": b2_pad,
    }


def _round_up(x, m):
    return ((x + m - 1) // m) * m


# ----------------------------- Generator glue ------------------------------

class GeneratorPallas:
    """JAX/Pallas equivalent of accent_estimator Generator."""

    def __init__(self, params, phoneme_size, vowel_size, consonant_size,
                 disable_mora_f0=False):
        self.folded = fold_params(params)
        self.phoneme_size = phoneme_size
        self.vowel_size = vowel_size
        self.consonant_size = consonant_size
        self.disable_mora_f0 = disable_mora_f0

    def forward(
        self,
        frame_f0_list: List[np.ndarray],
        frame_phoneme_list: List[np.ndarray],
        frame_mora_index_list: List[np.ndarray],
        mora_f0_list: List[np.ndarray],
        mora_vowel_list: List[np.ndarray],
        mora_consonant_list: List[np.ndarray],
    ):
        B = len(frame_f0_list)
        P, V, C = self.phoneme_size, self.vowel_size, self.consonant_size
        PF = P + 1
        MF = V + C + 1

        T = max(int(np.asarray(v).shape[0]) for v in frame_f0_list)
        M = max(int(np.asarray(v).shape[0]) for v in mora_f0_list)
        # Multiples of 16 keep bf16 packed-sublane layouts clean.
        T_pad = max(16, _round_up(T, 16))
        M_pad = max(16, _round_up(M, 16))

        idx = np.full((B, 1, T_pad), -1, np.int32)         # -1 = padded frame
        frame_feat = np.zeros((B, T_pad, PF), np.float32)  # [ph one-hot | f0]
        inv_cnt = np.ones((B, M_pad, 1), np.float32)
        mora_feat = np.zeros((B, M_pad, MF), np.float32)   # [vw | cn | mora_f0]
        mora_lens = []

        for b in range(B):
            ff = np.asarray(frame_f0_list[b], np.float32).reshape(-1, 1)
            fp = np.asarray(frame_phoneme_list[b]).reshape(-1).astype(np.int64)
            fm = np.asarray(frame_mora_index_list[b]).reshape(-1).astype(np.int64)
            mf = np.asarray(mora_f0_list[b], np.float32).reshape(-1, 1)
            mv = np.asarray(mora_vowel_list[b]).reshape(-1).astype(np.int64)
            mc = np.asarray(mora_consonant_list[b]).reshape(-1).astype(np.int64)

            t_i, m_i = ff.shape[0], mf.shape[0]
            mora_lens.append(m_i)

            if self.disable_mora_f0:
                mf = np.zeros_like(mf)

            idx[b, 0, :t_i] = fm
            frame_feat[b, np.arange(t_i), fp] = 1.0
            frame_feat[b, :t_i, P] = ff[:, 0]

            # Segment-mean normalizer; moras with zero frames clamp to 1
            # (their segment mean is 0, matching the previous behavior).
            counts = np.bincount(fm, minlength=M_pad).astype(np.float32)[:M_pad]
            inv_cnt[b, :, 0] = 1.0 / np.maximum(counts, 1.0)

            mora_feat[b, np.arange(m_i), mv] = 1.0
            mora_feat[b, np.arange(m_i), V + mc] = 1.0
            mora_feat[b, :m_i, V + C] = mf[:, 0]

        inputs = (
            jnp.asarray(idx),
            jnp.asarray(frame_feat, dtype=jnp.bfloat16),
            jnp.asarray(inv_cnt),
            jnp.asarray(mora_feat, dtype=jnp.bfloat16),
        )
        out = predictor_inference_pallas(*inputs, self.folded)
        out = np.asarray(jax.block_until_ready(out))

        results = []
        for b in range(B):
            o = out[b, :mora_lens[b], :4]   # padded moras sliced off
            results.append(dict(
                accent_start=jnp.asarray(o[:, 0]),
                accent_end=jnp.asarray(o[:, 1]),
                accent_phrase_start=jnp.asarray(o[:, 2]),
                accent_phrase_end=jnp.asarray(o[:, 3]),
            ))
        self._last_blocked = (inputs, out)   # kept for the self-test below
        return results


# --------------------------------- demo ------------------------------------

if __name__ == "__main__":
    PHONEME_SIZE = 8
    VOWEL_SIZE = 6
    CONSONANT_SIZE = 5

    key = jax.random.PRNGKey(0)
    params = init_params(key, PHONEME_SIZE, VOWEL_SIZE, CONSONANT_SIZE)

    rng = np.random.RandomState(0)

    def make_item(n_frame, n_mora):
        frame_f0 = rng.rand(n_frame, 1).astype(np.float32) * 5.0
        frame_ph = rng.randint(0, PHONEME_SIZE, size=(n_frame,)).astype(np.int32)
        fm = np.sort(rng.randint(0, n_mora, size=(n_frame,))).astype(np.int32)
        fm[:n_mora] = np.arange(n_mora)   # ensure every mora has >=1 frame
        fm = np.sort(fm)
        mora_f0 = rng.rand(n_mora, 1).astype(np.float32) * 5.0
        mora_vw = rng.randint(0, VOWEL_SIZE, size=(n_mora,)).astype(np.int32)
        mora_cn = rng.randint(0, CONSONANT_SIZE, size=(n_mora,)).astype(np.int32)
        return frame_f0, frame_ph, fm, mora_f0, mora_vw, mora_cn

    items = [make_item(32, 8), make_item(24, 6)]
    frame_f0_list = [it[0] for it in items]
    frame_phoneme_list = [it[1] for it in items]
    frame_mora_index_list = [it[2] for it in items]
    mora_f0_list = [it[3] for it in items]
    mora_vowel_list = [it[4] for it in items]
    mora_consonant_list = [it[5] for it in items]

    gen = GeneratorPallas(params, PHONEME_SIZE, VOWEL_SIZE, CONSONANT_SIZE,
                          disable_mora_f0=False)
    outputs = gen.forward(
        frame_f0_list, frame_phoneme_list, frame_mora_index_list,
        mora_f0_list, mora_vowel_list, mora_consonant_list,
    )

    assert len(outputs) == 2
    assert outputs[0]["accent_start"].shape == (8,)
    assert outputs[1]["accent_phrase_end"].shape == (6,)
    for o in outputs:
        for k in ("accent_start", "accent_end",
                  "accent_phrase_start", "accent_phrase_end"):
            jax.block_until_ready(o[k])
            assert bool(jnp.all(jnp.isfinite(o[k])))

    # Sanity check: Pallas output matches the pure-JAX reference on the
    # blocked/padded arrays.
    blocked_inputs, kernel_out = gen._last_blocked
    ref = np.asarray(jax.block_until_ready(
        _reference_blocked(*blocked_inputs, gen.folded)))
    assert np.allclose(kernel_out, ref, atol=5e-2, rtol=5e-2), (
        float(np.max(np.abs(kernel_out - ref))))

    print("KERNEL_OK")
</pallas_src>

<mosaic_0001>
module attributes {stable_mosaic.version = 11 : i64} {
  func.func @_predictor_kernel(%arg0: i32, %arg1: memref<1x1x32xi32, #tpu.memory_space<vmem>>, %arg2: memref<1x32x9xbf16, #tpu.memory_space<vmem>>, %arg3: memref<1x16x1xf32, #tpu.memory_space<vmem>>, %arg4: memref<1x16x12xbf16, #tpu.memory_space<vmem>>, %arg5: memref<9x32xbf16, #tpu.memory_space<vmem>>, %arg6: memref<12x32xbf16, #tpu.memory_space<vmem>>, %arg7: memref<1x32xf32, #tpu.memory_space<vmem>>, %arg8: memref<32x128xf32, #tpu.memory_space<vmem>>, %arg9: memref<1x128xf32, #tpu.memory_space<vmem>>, %arg10: memref<1x16x128xf32, #tpu.memory_space<vmem>>) attributes {dimension_semantics = [#tpu.dimension_semantics<parallel>], iteration_bounds = array<i64: 2>, scalar_prefetch = 0 : i64, scratch_operands = 0 : i64, tpu.core_type = #tpu.core_type<tc>, window_params = [{transform_indices = @transform_0, window_bounds = array<i64: 1, 1, 32>}, {transform_indices = @transform_1, window_bounds = array<i64: 1, 32, 9>}, {transform_indices = @transform_2, window_bounds = array<i64: 1, 16, 1>}, {transform_indices = @transform_3, window_bounds = array<i64: 1, 16, 12>}, {pipeline_mode = #tpu.pipeline_mode<synchronous>, transform_indices = @transform_4, window_bounds = array<i64: 9, 32>}, {pipeline_mode = #tpu.pipeline_mode<synchronous>, transform_indices = @transform_5, window_bounds = array<i64: 12, 32>}, {pipeline_mode = #tpu.pipeline_mode<synchronous>, transform_indices = @transform_6, window_bounds = array<i64: 1, 32>}, {pipeline_mode = #tpu.pipeline_mode<synchronous>, transform_indices = @transform_7, window_bounds = array<i64: 32, 128>}, {pipeline_mode = #tpu.pipeline_mode<synchronous>, transform_indices = @transform_8, window_bounds = array<i64: 1, 128>}, {transform_indices = @transform_9, window_bounds = array<i64: 1, 16, 128>}]} {
    %c0 = arith.constant 0 : index
    %c0_0 = arith.constant 0 : index
    %c0_1 = arith.constant 0 : index
    %0 = vector.load %arg1[%c0, %c0_0, %c0_1] : memref<1x1x32xi32, #tpu.memory_space<vmem>>, vector<1x1x32xi32>
    %1 = vector.shape_cast %0 : vector<1x1x32xi32> to vector<1x32xi32>
    %2 = tpu.iota {dimensions = array<i32: 0>} : vector<16x32xi32>
    %3 = vector.broadcast %1 : vector<1x32xi32> to vector<16x32xi32>
    %4 = arith.cmpi eq, %2, %3 : vector<16x32xi32>
    %cst = arith.constant 1.000000e+00 : f32
    %cst_2 = arith.constant 0.000000e+00 : f32
    %5 = vector.broadcast %cst : f32 to vector<16x32xf32>
    %6 = vector.broadcast %cst_2 : f32 to vector<16x32xf32>
    %7 = arith.select %4, %5, %6 : vector<16x32xi1>, vector<16x32xf32>
    %8 = arith.truncf %7 : vector<16x32xf32> to vector<16x32xbf16>
    %c0_3 = arith.constant 0 : index
    %c0_4 = arith.constant 0 : index
    %c0_5 = arith.constant 0 : index
    %9 = vector.load %arg2[%c0_3, %c0_4, %c0_5] : memref<1x32x9xbf16, #tpu.memory_space<vmem>>, vector<1x32x9xbf16>
    %10 = vector.shape_cast %9 : vector<1x32x9xbf16> to vector<32x9xbf16>
    %cst_6 = arith.constant dense<0.000000e+00> : vector<16x9xf32>
    %11 = tpu.matmul %8, %10, %cst_6 {dimension_numbers = #tpu.dot_dimension_numbers<[1], [0], [0], [1], [0, 0, 1, 1], [], []>} : vector<16x32xbf16>, vector<32x9xbf16>, vector<16x9xf32> -> vector<16x9xf32>
    %c0_7 = arith.constant 0 : index
    %c0_8 = arith.constant 0 : index
    %c0_9 = arith.constant 0 : index
    %12 = vector.load %arg3[%c0_7, %c0_8, %c0_9] : memref<1x16x1xf32, #tpu.memory_space<vmem>>, vector<1x16x1xf32>
    %13 = vector.shape_cast %12 : vector<1x16x1xf32> to vector<16x1xf32>
    %14 = vector.broadcast %13 : vector<16x1xf32> to vector<16x9xf32>
    %15 = arith.mulf %11, %14 : vector<16x9xf32>
    %16 = arith.truncf %15 : vector<16x9xf32> to vector<16x9xbf16>
    %c0_10 = arith.constant 0 : index
    %c0_11 = arith.constant 0 : index
    %17 = vector.load %arg5[%c0_10, %c0_11] : memref<9x32xbf16, #tpu.memory_space<vmem>>, vector<9x32xbf16>
    %cst_12 = arith.constant dense<0.000000e+00> : vector<16x32xf32>
    %18 = tpu.matmul %16, %17, %cst_12 {dimension_numbers = #tpu.dot_dimension_numbers<[1], [0], [0], [1], [0, 0, 1, 1], [], []>} : vector<16x9xbf16>, vector<9x32xbf16>, vector<16x32xf32> -> vector<16x32xf32>
    %c0_13 = arith.constant 0 : index
    %c0_14 = arith.constant 0 : index
    %c0_15 = arith.constant 0 : index
    %19 = vector.load %arg4[%c0_13, %c0_14, %c0_15] : memref<1x16x12xbf16, #tpu.memory_space<vmem>>, vector<1x16x12xbf16>
    %20 = vector.shape_cast %19 : vector<1x16x12xbf16> to vector<16x12xbf16>
    %c0_16 = arith.constant 0 : index
    %c0_17 = arith.constant 0 : index
    %21 = vector.load %arg6[%c0_16, %c0_17] : memref<12x32xbf16, #tpu.memory_space<vmem>>, vector<12x32xbf16>
    %cst_18 = arith.constant dense<0.000000e+00> : vector<16x32xf32>
    %22 = tpu.matmul %20, %21, %cst_18 {dimension_numbers = #tpu.dot_dimension_numbers<[1], [0], [0], [1], [0, 0, 1, 1], [], []>} : vector<16x12xbf16>, vector<12x32xbf16>, vector<16x32xf32> -> vector<16x32xf32>
    %23 = arith.addf %18, %22 : vector<16x32xf32>
    %c0_19 = arith.constant 0 : index
    %c0_20 = arith.constant 0 : index
    %24 = vector.load %arg7[%c0_19, %c0_20] : memref<1x32xf32, #tpu.memory_space<vmem>>, vector<1x32xf32>
    %25 = vector.broadcast %24 : vector<1x32xf32> to vector<16x32xf32>
    %26 = arith.addf %23, %25 : vector<16x32xf32>
    %cst_21 = arith.constant 0.000000e+00 : f32
    %27 = vector.broadcast %cst_21 : f32 to vector<16x32xf32>
    %28 = arith.maximumf %26, %27 : vector<16x32xf32>
    %c0_22 = arith.constant 0 : index
    %c0_23 = arith.constant 0 : index
    %29 = vector.load %arg8[%c0_22, %c0_23] : memref<32x128xf32, #tpu.memory_space<vmem>>, vector<32x128xf32>
    %cst_24 = arith.constant dense<0.000000e+00> : vector<16x128xf32>
    %30 = tpu.matmul %28, %29, %cst_24 {dimension_numbers = #tpu.dot_dimension_numbers<[1], [0], [0], [1], [0, 0, 1, 1], [], []>} : vector<16x32xf32>, vector<32x128xf32>, vector<16x128xf32> -> vector<16x128xf32>
    %c0_25 = arith.constant 0 : index
    %c0_26 = arith.constant 0 : index
    %31 = vector.load %arg9[%c0_25, %c0_26] : memref<1x128xf32, #tpu.memory_space<vmem>>, vector<1x128xf32>
    %32 = vector.broadcast %31 : vector<1x128xf32> to vector<16x128xf32>
    %33 = arith.addf %30, %32 : vector<16x128xf32>
    %c0_27 = arith.constant 0 : index
    %c0_28 = arith.constant 0 : index
    %c0_29 = arith.constant 0 : index
    %34 = vector.load %arg10[%c0_27, %c0_28, %c0_29] : memref<1x16x128xf32, #tpu.memory_space<vmem>>, vector<1x16x128xf32>
    %35 = vector.shape_cast %34 : vector<1x16x128xf32> to vector<16x128xf32>
    %36 = vector.shape_cast %33 : vector<16x128xf32> to vector<1x16x128xf32>
    tpu.vector_store %arg10[%c0_27, %c0_28, %c0_29], %36 {strides = array<i32>} : memref<1x16x128xf32, #tpu.memory_space<vmem>>, vector<1x16x128xf32>,
    return
  }
  func.func @transform_0(%arg0: i32) -> (i32, i32, i32) {
    %c0_i32 = arith.constant 0 : i32
    %c0_i32_0 = arith.constant 0 : i32
    %c0_i32_1 = arith.constant 0 : i32
    return %arg0, %c0_i32, %c0_i32_0 : i32, i32, i32
  }
  func.func @transform_1(%arg0: i32) -> (i32, i32, i32) {
    %c0_i32 = arith.constant 0 : i32
    %c0_i32_0 = arith.constant 0 : i32
    %c0_i32_1 = arith.constant 0 : i32
    return %arg0, %c0_i32, %c0_i32_0 : i32, i32, i32
  }
  func.func @transform_2(%arg0: i32) -> (i32, i32, i32) {
    %c0_i32 = arith.constant 0 : i32
    %c0_i32_0 = arith.constant 0 : i32
    %c0_i32_1 = arith.constant 0 : i32
    return %arg0, %c0_i32, %c0_i32_0 : i32, i32, i32
  }
  func.func @transform_3(%arg0: i32) -> (i32, i32, i32) {
    %c0_i32 = arith.constant 0 : i32
    %c0_i32_0 = arith.constant 0 : i32
    %c0_i32_1 = arith.constant 0 : i32
    return %arg0, %c0_i32, %c0_i32_0 : i32, i32, i32
  }
  func.func @transform_4(%arg0: i32) -> (i32, i32) {
    %c0_i32 = arith.constant 0 : i32
    %c0_i32_0 = arith.constant 0 : i32
    %c0_i32_1 = arith.constant 0 : i32
    return %c0_i32, %c0_i32_0 : i32, i32
  }
  func.func @transform_5(%arg0: i32) -> (i32, i32) {
    %c0_i32 = arith.constant 0 : i32
    %c0_i32_0 = arith.constant 0 : i32
    %c0_i32_1 = arith.constant 0 : i32
    return %c0_i32, %c0_i32_0 : i32, i32
  }
  func.func @transform_6(%arg0: i32) -> (i32, i32) {
    %c0_i32 = arith.constant 0 : i32
    %c0_i32_0 = arith.constant 0 : i32
    %c0_i32_1 = arith.constant 0 : i32
    return %c0_i32, %c0_i32_0 : i32, i32
  }
  func.func @transform_7(%arg0: i32) -> (i32, i32) {
    %c0_i32 = arith.constant 0 : i32
    %c0_i32_0 = arith.constant 0 : i32
    %c0_i32_1 = arith.constant 0 : i32
    return %c0_i32, %c0_i32_0 : i32, i32
  }
  func.func @transform_8(%arg0: i32) -> (i32, i32) {
    %c0_i32 = arith.constant 0 : i32
    %c0_i32_0 = arith.constant 0 : i32
    %c0_i32_1 = arith.constant 0 : i32
    return %c0_i32, %c0_i32_0 : i32, i32
  }
  func.func @transform_9(%arg0: i32) -> (i32, i32, i32) {
    %c0_i32 = arith.constant 0 : i32
    %c0_i32_0 = arith.constant 0 : i32
    %c0_i32_1 = arith.constant 0 : i32
    return %arg0, %c0_i32, %c0_i32_0 : i32, i32, i32
  }
}

</mosaic_0001>

<llo_original>
// kernel: tpu_custom_call.1
$region0: #{tpu_custom_call.1}
  #allocation0 [shape = 'u32[]', space=smem, size = 0x4, offset = 0x4, fixed_abs, tag = 'smem constant byte address 0x4 - core index']
  #allocation1 [shape = 'u32[144,128]{1,0:T(1,128)}', space=vmem, size = 0x12000, scoped, tag = 'internal scratch']
  %s0 = inlined_call_operand.vmem [shape: s32[2,1,32], index: 0, kind: input, shape index: {}]
  %s1 = inlined_call_operand.vmem [shape: bf16[2,32,9], index: 1, kind: input, shape index: {}]
  %s2 = inlined_call_operand.vmem [shape: f32[2,16,1], index: 2, kind: input, shape index: {}]
  %s3 = inlined_call_operand.vmem [shape: bf16[2,16,12], index: 3, kind: input, shape index: {}]
  %s4 = inlined_call_operand.vmem [shape: bf16[9,32], index: 4, kind: input, shape index: {}]
  %s5 = inlined_call_operand.vmem [shape: bf16[12,32], index: 5, kind: input, shape index: {}]
  %s6 = inlined_call_operand.vmem [shape: f32[1,32], index: 6, kind: input, shape index: {}]
  %s7 = inlined_call_operand.vmem [shape: f32[32,128], index: 7, kind: input, shape index: {}]
  %s8 = inlined_call_operand.vmem [shape: f32[1,128], index: 8, kind: input, shape index: {}]
  %s9 = inlined_call_operand.hbm [shape: f32[2,16,128], index: 9, kind: output, shape index: {}]
  %s10 = sld [smem:[#allocation0]]
  $region69: #{tpu_custom_call.1} parent=0
    _
  %s12 = ssub.s32 1, %s10
  %s13 = scalar_select 0, %s12, %s10
  $region1: #{tpu_custom_call.1} parent=0
    #allocation2 [shape = 'u8[16384]{0}', space=vmem, size = 0x4000, scoped, tag = 'output window, operand 0']
    #allocation3 [shape = 's32[2]{0}', space=sflag, size = 0x8, scoped, tag = 'scoped memory for tpu_custom_call.1']
    %14 = vsyncpa [#allocation3], 0
    %s15 = scalar_lea.sflag [#allocation3], 1
    %16 = vsyncpa %s15, 0
    loop: start=0, step=1, limit=4
    $region2: #{tpu_custom_call.1} parent=1 // loop_pre_header
      _
    $region3: #{tpu_custom_call.1} parent=1 // loop_header
      %s18 = sphi 0, %s22
      %p19 = scmp.ge.s32.totalorder %s18, 4
      %s28 = sphi 0, %s30
      %s31 = sphi 0, %s28
      %s32 = sphi 0, %s31
      %s48 = sphi 0, %s32
      %s54 = sphi 0, %s56
      %s57 = sphi 0, %s54
      %s58 = sphi 0, %s57
      %s74 = sphi 0, %s58
      %s80 = sphi 0, %s82
      %s83 = sphi 0, %s80
      %s84 = sphi 0, %s83
      %s100 = sphi 0, %s84
      %s106 = sphi 0, %s108
      %s109 = sphi 0, %s106
      %s110 = sphi 0, %s109
      %s126 = sphi 0, %s110
      %s130 = sphi 0, %s130
      %s132 = sphi 0, %s130
      %s133 = sphi 0, %s132
      %s147 = sphi 0, %s133
      %s151 = sphi 0, %s151
      %s153 = sphi 0, %s151
      %s154 = sphi 0, %s153
      %s168 = sphi 0, %s154
      %s172 = sphi 0, %s172
      %s174 = sphi 0, %s172
      %s175 = sphi 0, %s174
      %s189 = sphi 0, %s175
      %s193 = sphi 0, %s193
      %s195 = sphi 0, %s193
      %s196 = sphi 0, %s195
      %s210 = sphi 0, %s196
      %s214 = sphi 0, %s214
      %s216 = sphi 0, %s214
      %s217 = sphi 0, %s216
      %s231 = sphi 0, %s217
      %s237 = sphi 0, %s239
      %s240 = sphi 0, %s237
      %s241 = sphi 0, %s240
      %s257 = sphi 0, %s241
    $region4: #{tpu_custom_call.1} parent=1 // loop_header_branch
      %21 = sbr.rel (%p19) target = $region8
    $region5: #{tpu_custom_call.1} parent=1 // loop_body
      %s23 = ssub.s32 %s18, 1
      %s24 = ssub.s32 %s18, 2
      %s25 = sadd.s32 %s18, 1
      %s26 = ssub.s32 %s18, %s25
      %p27 = scmp.eq.s32.totalorder %s26, 0
      %s29 = sadd.s32 %s28, 1
      %s30 = scalar_select %p27, %s28, %s29
      %p33 = pneg %p27
      %p34 = scmp.eq.s32.totalorder %s18, 1
      %p35 = por %p33, %p34
      %p36 = scmp.ne.s32.totalorder %s28, %s31
      %p37 = scmp.eq.s32.totalorder %s18, 0
      %p38 = por %p36, %p37
      %p39 = scmp.ne.s32.totalorder %s28, %s31
      %p40 = scmp.eq.s32.totalorder %s23, 1
      %p41 = por %p39, %p40
      %p42 = scmp.ne.s32.totalorder %s31, %s32
      %p43 = scmp.eq.s32.totalorder %s23, 0
      %p44 = por %p42, %p43
      %p45 = scmp.ne.s32.totalorder %s31, %s32
      %p46 = scmp.eq.s32.totalorder %s24, 1
      %p47 = por %p45, %p46
      %p49 = scmp.ne.s32.totalorder %s32, %s48
      %p50 = scmp.eq.s32.totalorder %s24, 0
      %p51 = por %p49, %p50
      %s52 = ssub.s32 %s18, %s25
      %p53 = scmp.eq.s32.totalorder %s52, 0
      %s55 = sadd.s32 %s54, 1
      %s56 = scalar_select %p53, %s54, %s55
      %p59 = pneg %p53
      %p60 = scmp.eq.s32.totalorder %s18, 1
      %p61 = por %p59, %p60
      %p62 = scmp.ne.s32.totalorder %s54, %s57
      %p63 = scmp.eq.s32.totalorder %s18, 0
      %p64 = por %p62, %p63
      %p65 = scmp.ne.s32.totalorder %s54, %s57
      %p66 = scmp.eq.s32.totalorder %s23, 1
      %p67 = por %p65, %p66
      %p68 = scmp.ne.s32.totalorder %s57, %s58
      %p69 = scmp.eq.s32.totalorder %s23, 0
      %p70 = por %p68, %p69
      %p71 = scmp.ne.s32.totalorder %s57, %s58
      %p72 = scmp.eq.s32.totalorder %s24, 1
      %p73 = por %p71, %p72
      %p75 = scmp.ne.s32.totalorder %s58, %s74
      %p76 = scmp.eq.s32.totalorder %s24, 0
      %p77 = por %p75, %p76
      %s78 = ssub.s32 %s18, %s25
      %p79 = scmp.eq.s32.totalorder %s78, 0
      %s81 = sadd.s32 %s80, 1
      %s82 = scalar_select %p79, %s80, %s81
      %p85 = pneg %p79
      %p86 = scmp.eq.s32.totalorder %s18, 1
      %p87 = por %p85, %p86
      %p88 = scmp.ne.s32.totalorder %s80, %s83
      %p89 = scmp.eq.s32.totalorder %s18, 0
      %p90 = por %p88, %p89
      %p91 = scmp.ne.s32.totalorder %s80, %s83
      %p92 = scmp.eq.s32.totalorder %s23, 1
      %p93 = por %p91, %p92
      %p94 = scmp.ne.s32.totalorder %s83, %s84
      %p95 = scmp.eq.s32.totalorder %s23, 0
      %p96 = por %p94, %p95
      %p97 = scmp.ne.s32.totalorder %s83, %s84
      %p98 = scmp.eq.s32.totalorder %s24, 1
      %p99 = por %p97, %p98
      %p101 = scmp.ne.s32.totalorder %s84, %s100
      %p102 = scmp.eq.s32.totalorder %s24, 0
      %p103 = por %p101, %p102
      %s104 = ssub.s32 %s18, %s25
      %p105 = scmp.eq.s32.totalorder %s104, 0
      %s107 = sadd.s32 %s106, 1
      %s108 = scalar_select %p105, %s106, %s107
      %p111 = pneg %p105
      %p112 = scmp.eq.s32.totalorder %s18, 1
      %p113 = por %p111, %p112
      %p114 = scmp.ne.s32.totalorder %s106, %s109
      %p115 = scmp.eq.s32.totalorder %s18, 0
      %p116 = por %p114, %p115
      %p117 = scmp.ne.s32.totalorder %s106, %s109
      %p118 = scmp.eq.s32.totalorder %s23, 1
      %p119 = por %p117, %p118
      %p120 = scmp.ne.s32.totalorder %s109, %s110
      %p121 = scmp.eq.s32.totalorder %s23, 0
      %p122 = por %p120, %p121
      %p123 = scmp.ne.s32.totalorder %s109, %s110
      %p124 = scmp.eq.s32.totalorder %s24, 1
      %p125 = por %p123, %p124
      %p127 = scmp.ne.s32.totalorder %s110, %s126
      %p128 = scmp.eq.s32.totalorder %s24, 0
      %p129 = por %p127, %p128
      %s131 = sadd.s32 %s130, 1
      %p134 = scmp.eq.s32.totalorder %s18, 1
      %p135 = scmp.ne.s32.totalorder %s130, %s132
      %p136 = scmp.eq.s32.totalorder %s18, 0
      %p137 = por %p135, %p136
      %p138 = scmp.ne.s32.totalorder %s130, %s132
      %p139 = scmp.eq.s32.totalorder %s23, 1
      %p140 = por %p138, %p139
      %p141 = scmp.ne.s32.totalorder %s132, %s133
      %p142 = scmp.eq.s32.totalorder %s23, 0
      %p143 = por %p141, %p142
      %p144 = scmp.ne.s32.totalorder %s132, %s133
      %p145 = scmp.eq.s32.totalorder %s24, 1
      %p146 = por %p144, %p145
      %p148 = scmp.ne.s32.totalorder %s133, %s147
      %p149 = scmp.eq.s32.totalorder %s24, 0
      %p150 = por %p148, %p149
      %s152 = sadd.s32 %s151, 1
      %p155 = scmp.eq.s32.totalorder %s18, 1
      %p156 = scmp.ne.s32.totalorder %s151, %s153
      %p157 = scmp.eq.s32.totalorder %s18, 0
      %p158 = por %p156, %p157
      %p159 = scmp.ne.s32.totalorder %s151, %s153
      %p160 = scmp.eq.s32.totalorder %s23, 1
      %p161 = por %p159, %p160
      %p162 = scmp.ne.s32.totalorder %s153, %s154
      %p163 = scmp.eq.s32.totalorder %s23, 0
      %p164 = por %p162, %p163
      %p165 = scmp.ne.s32.totalorder %s153, %s154
      %p166 = scmp.eq.s32.totalorder %s24, 1
      %p167 = por %p165, %p166
      %p169 = scmp.ne.s32.totalorder %s154, %s168
      %p170 = scmp.eq.s32.totalorder %s24, 0
      %p171 = por %p169, %p170
      %s173 = sadd.s32 %s172, 1
      %p176 = scmp.eq.s32.totalorder %s18, 1
      %p177 = scmp.ne.s32.totalorder %s172, %s174
      %p178 = scmp.eq.s32.totalorder %s18, 0
      %p179 = por %p177, %p178
      %p180 = scmp.ne.s32.totalorder %s172, %s174
      %p181 = scmp.eq.s32.totalorder %s23, 1
      %p182 = por %p180, %p181
      %p183 = scmp.ne.s32.totalorder %s174, %s175
      %p184 = scmp.eq.s32.totalorder %s23, 0
      %p185 = por %p183, %p184
      %p186 = scmp.ne.s32.totalorder %s174, %s175
      %p187 = scmp.eq.s32.totalorder %s24, 1
      %p188 = por %p186, %p187
      %p190 = scmp.ne.s32.totalorder %s175, %s189
      %p191 = scmp.eq.s32.totalorder %s24, 0
      %p192 = por %p190, %p191
      %s194 = sadd.s32 %s193, 1
      %p197 = scmp.eq.s32.totalorder %s18, 1
      %p198 = scmp.ne.s32.totalorder %s193, %s195
      %p199 = scmp.eq.s32.totalorder %s18, 0
      %p200 = por %p198, %p199
      %p201 = scmp.ne.s32.totalorder %s193, %s195
      %p202 = scmp.eq.s32.totalorder %s23, 1
      %p203 = por %p201, %p202
      %p204 = scmp.ne.s32.totalorder %s195, %s196
      %p205 = scmp.eq.s32.totalorder %s23, 0
      %p206 = por %p204, %p205
      %p207 = scmp.ne.s32.totalorder %s195, %s196
      %p208 = scmp.eq.s32.totalorder %s24, 1
      %p209 = por %p207, %p208
      %p211 = scmp.ne.s32.totalorder %s196, %s210
      %p212 = scmp.eq.s32.totalorder %s24, 0
      %p213 = por %p211, %p212
      %s215 = sadd.s32 %s214, 1
      %p218 = scmp.eq.s32.totalorder %s18, 1
      %p219 = scmp.ne.s32.totalorder %s214, %s216
      %p220 = scmp.eq.s32.totalorder %s18, 0
      %p221 = por %p219, %p220
      %p222 = scmp.ne.s32.totalorder %s214, %s216
      %p223 = scmp.eq.s32.totalorder %s23, 1
      %p224 = por %p222, %p223
      %p225 = scmp.ne.s32.totalorder %s216, %s217
      %p226 = scmp.eq.s32.totalorder %s23, 0
      %p227 = por %p225, %p226
      %p228 = scmp.ne.s32.totalorder %s216, %s217
      %p229 = scmp.eq.s32.totalorder %s24, 1
      %p230 = por %p228, %p229
      %p232 = scmp.ne.s32.totalorder %s217, %s231
      %p233 = scmp.eq.s32.totalorder %s24, 0
      %p234 = por %p232, %p233
      %s235 = ssub.s32 %s18, %s25
      %p236 = scmp.eq.s32.totalorder %s235, 0
      %s238 = sadd.s32 %s237, 1
      %s239 = scalar_select %p236, %s237, %s238
      %p242 = pneg %p236
      %p243 = scmp.eq.s32.totalorder %s18, 1
      %p244 = por %p242, %p243
      %p245 = scmp.ne.s32.totalorder %s237, %s240
      %p246 = scmp.eq.s32.totalorder %s18, 0
      %p247 = por %p245, %p246
      %p248 = scmp.ne.s32.totalorder %s237, %s240
      %p249 = scmp.eq.s32.totalorder %s23, 1
      %p250 = por %p248, %p249
      %p251 = scmp.ne.s32.totalorder %s240, %s241
      %p252 = scmp.eq.s32.totalorder %s23, 0
      %p253 = por %p251, %p252
      %p254 = scmp.ne.s32.totalorder %s240, %s241
      %p255 = scmp.eq.s32.totalorder %s24, 1
      %p256 = por %p254, %p255
      %p258 = scmp.ne.s32.totalorder %s241, %s257
      %p259 = scmp.eq.s32.totalorder %s24, 0
      %p260 = por %p258, %p259
      %p261 = scmp.le.s32.totalorder 1, %s18
      %p262 = scmp.lt.s32.totalorder %s18, 3
      %p263 = pnand %p261, %p262
      %p264 = pneg %p263
      // Predicated region
      $region9: #{tpu_custom_call.1} parent=5 // pred_check
        _
      $region10: #{tpu_custom_call.1} parent=5 // pred_check_branch
        %266 = sbr.rel (%p263) target = $region12
      $region11: #{tpu_custom_call.1} parent=5 // pred_region
        %s267 = ssub.s32 %s18, 1
        // Predicated region
        $region13: #{tpu_custom_call.1} parent=11 // pred_check
          %p268 = pneg %p143
        $region14: #{tpu_custom_call.1} parent=11 // pred_check_branch
          %270 = sbr.rel (%p268) target = $region16
        $region15: #{tpu_custom_call.1} parent=11 // pred_region
          _
        $region16: #{tpu_custom_call.1} parent=11 // pred_fallthru
          _
        // Predicated region
        $region17: #{tpu_custom_call.1} parent=11 // pred_check
          %p271 = pneg %p164
        $region18: #{tpu_custom_call.1} parent=11 // pred_check_branch
          %273 = sbr.rel (%p271) target = $region20
        $region19: #{tpu_custom_call.1} parent=11 // pred_region
          _
        $region20: #{tpu_custom_call.1} parent=11 // pred_fallthru
          _
        // Predicated region
        $region21: #{tpu_custom_call.1} parent=11 // pred_check
          %p274 = pneg %p185
        $region22: #{tpu_custom_call.1} parent=11 // pred_check_branch
          %276 = sbr.rel (%p274) target = $region24
        $region23: #{tpu_custom_call.1} parent=11 // pred_region
          _
        $region24: #{tpu_custom_call.1} parent=11 // pred_fallthru
          _
        // Predicated region
        $region25: #{tpu_custom_call.1} parent=11 // pred_check
          %p277 = pneg %p206
        $region26: #{tpu_custom_call.1} parent=11 // pred_check_branch
          %279 = sbr.rel (%p277) target = $region28
        $region27: #{tpu_custom_call.1} parent=11 // pred_region
          _
        $region28: #{tpu_custom_call.1} parent=11 // pred_fallthru
          _
        // Predicated region
        $region29: #{tpu_custom_call.1} parent=11 // pred_check
          %p280 = pneg %p227
        $region30: #{tpu_custom_call.1} parent=11 // pred_check_branch
          %282 = sbr.rel (%p280) target = $region32
        $region31: #{tpu_custom_call.1} parent=11 // pred_region
          _
        $region32: #{tpu_custom_call.1} parent=11 // pred_fallthru
          _
      $region12: #{tpu_custom_call.1} parent=5 // pred_fallthru
        _
      %p283 = scmp.lt.s32.totalorder %s18, 2
      // Predicated region
      $region33: #{tpu_custom_call.1} parent=5 // pred_check
        %p284 = pneg %p283
      $region34: #{tpu_custom_call.1} parent=5 // pred_check_branch
        %286 = sbr.rel (%p284) target = $region36
      $region35: #{tpu_custom_call.1} parent=5 // pred_region
        // Predicated region
        $region37: #{tpu_custom_call.1} parent=35 // pred_check
          %p287 = pneg %p38
        $region38: #{tpu_custom_call.1} parent=35 // pred_check_branch
          %289 = sbr.rel (%p287) target = $region40
        $region39: #{tpu_custom_call.1} parent=35 // pred_region
          %p290 = scmp.lt.s32.totalorder %s18, 1
          %s291 = scalar_select %p290, %s18, 1
          %s292 = scalar_lea.vmem %s0, %s291
        $region40: #{tpu_custom_call.1} parent=35 // pred_fallthru
          _
        // Predicated region
        $region41: #{tpu_custom_call.1} parent=35 // pred_check
          %p293 = pneg %p64
        $region42: #{tpu_custom_call.1} parent=35 // pred_check_branch
          %295 = sbr.rel (%p293) target = $region44
        $region43: #{tpu_custom_call.1} parent=35 // pred_region
          %p296 = scmp.lt.s32.totalorder %s18, 1
          %s297 = scalar_select %p296, %s18, 1
          %s298 = smul.addr %s297, 4
          %s299 = smul.addr %s298, 4
          %s300 = scalar_lea.vmem %s1, %s299
        $region44: #{tpu_custom_call.1} parent=35 // pred_fallthru
          _
        // Predicated region
        $region45: #{tpu_custom_call.1} parent=35 // pred_check
          %p301 = pneg %p90
        $region46: #{tpu_custom_call.1} parent=35 // pred_check_branch
          %303 = sbr.rel (%p301) target = $region48
        $region47: #{tpu_custom_call.1} parent=35 // pred_region
          %p304 = scmp.lt.s32.totalorder %s18, 1
          %s305 = scalar_select %p304, %s18, 1
          %s306 = smul.addr %s305, 2
          %s307 = smul.addr %s306, 8
          %s308 = scalar_lea.vmem %s2, %s307
        $region48: #{tpu_custom_call.1} parent=35 // pred_fallthru
          _
        // Predicated region
        $region49: #{tpu_custom_call.1} parent=35 // pred_check
          %p309 = pneg %p116
        $region50: #{tpu_custom_call.1} parent=35 // pred_check_branch
          %311 = sbr.rel (%p309) target = $region52
        $region51: #{tpu_custom_call.1} parent=35 // pred_region
          %p312 = scmp.lt.s32.totalorder %s18, 1
          %s313 = scalar_select %p312, %s18, 1
          %s314 = smul.addr %s313, 2
          %s315 = smul.addr %s314, 4
          %s316 = scalar_lea.vmem %s3, %s315
        $region52: #{tpu_custom_call.1} parent=35 // pred_fallthru
          _
      $region36: #{tpu_custom_call.1} parent=5 // pred_fallthru
        _
      %p317 = scmp.le.s32.totalorder 1, %s18
      %p318 = scmp.lt.s32.totalorder %s18, 3
      %p319 = pnand %p317, %p318
      %p320 = pneg %p319
      // Predicated region
      $region53: #{tpu_custom_call.1} parent=5 // pred_check
        _
      $region54: #{tpu_custom_call.1} parent=5 // pred_check_branch
        %322 = sbr.rel (%p319) target = $region56
      $region55: #{tpu_custom_call.1} parent=5 // pred_region
        %s323 = ssub.s32 %s18, 1
        %p324 = scmp.lt.s32.totalorder %s23, 1
        %s325 = scalar_select %p324, %s23, 1
        %s326 = scalar_lea.vmem %s0, %s325
        %p327 = pneg %p44
        %p328 = pneg %p41
        %p329 = scmp.lt.s32.totalorder %s23, 1
        %s330 = scalar_select %p329, %s23, 1
        %s331 = smul.addr %s330, 4
        %s332 = smul.addr %s331, 4
        %s333 = scalar_lea.vmem %s1, %s332
        %p334 = pneg %p70
        %p335 = pneg %p67
        %p336 = scmp.lt.s32.totalorder %s23, 1
        %s337 = scalar_select %p336, %s23, 1
        %s338 = smul.addr %s337, 2
        %s339 = smul.addr %s338, 8
        %s340 = scalar_lea.vmem %s2, %s339
        %p341 = pneg %p96
        %p342 = pneg %p93
        %p343 = scmp.lt.s32.totalorder %s23, 1
        %s344 = scalar_select %p343, %s23, 1
        %s345 = smul.addr %s344, 2
        %s346 = smul.addr %s345, 4
        %s347 = scalar_lea.vmem %s3, %s346
        %p348 = pneg %p122
        %p349 = pneg %p119
        %p350 = pneg %p143
        %p351 = pneg %p140
        %p352 = pneg %p164
        %p353 = pneg %p161
        %p354 = pneg %p185
        %p355 = pneg %p182
        %p356 = pneg %p206
        %p357 = pneg %p203
        %p358 = pneg %p227
        %p359 = pneg %p224
        %p360 = pneg %p253
        %p361 = pneg %p250
        %s362 = sand.u32 %s240, 1
        %s363 = scalar_lea.sflag [#allocation3], %s362
        %s364 = sand.u32 %s240, 1
        %s365 = smul.addr %s364, 16
        %s366 = scalar_lea.vmem [#allocation2], %s365
        %p367 = scmp.lt.s32.totalorder %s23, 1
        %s368 = scalar_select %p367, %s23, 1
        %s369 = scalar_lea.vmem %s0, %s368
        %p370 = scmp.lt.s32.totalorder %s23, 1
        %s371 = scalar_select %p370, %s23, 1
        %s372 = smul.addr %s371, 4
        %s373 = smul.addr %s372, 4
        %s374 = scalar_lea.vmem %s1, %s373
        %p375 = scmp.lt.s32.totalorder %s23, 1
        %s376 = scalar_select %p375, %s23, 1
        %s377 = smul.addr %s376, 2
        %s378 = smul.addr %s377, 8
        %s379 = scalar_lea.vmem %s2, %s378
        %p380 = scmp.lt.s32.totalorder %s23, 1
        %s381 = scalar_select %p380, %s23, 1
        %s382 = smul.addr %s381, 2
        %s383 = smul.addr %s382, 4
        %s384 = scalar_lea.vmem %s3, %s383
        %v386 = vld [vmem:[%s369] sm:$0x1]
        %v387 = vlaneseq
        %v388 = vshrl.u32 %v387, 7
        %v389 = vadd.s32 %v388, 8
        %v390 = vlaneseq
        %v391 = vshrl.u32 %v390, 7
        %v392 = vsub.s32 0, %v391
        %v393 = vrot.slane %v386, %v392
        %vm394 = vcmp.eq.s32.totalorder %v388, %v393
        %vm395 = vcmp.eq.s32.totalorder %v389, %v393
        %v396 = vsel %vm394, 1.0, 0.0
        %v397 = vsel %vm395, 1.0, 0.0
        %v398 = vpack.c.bf16 %v397, %v396
        %v399 = vld [vmem:[%s374] sm:$0xf]
        %v400 = vld [vmem:[%s374 + $0x4] sm:$0xf]
        %v401 = vld [vmem:[%s374 + $0x8] sm:$0xf]
        %v402 = vld [vmem:[%s374 + $0xc] sm:$0xf]
        %v407 = vunpack.c.l.b16 %v399
        %v408 = vunpack.c.l.b16 %v400
        %v409 = vunpack.c.l.b16 %v401
        %v410 = vunpack.c.l.b16 %v402
        %v411 = vpack.c.b16 %v408, %v407
        %v412 = vpack.c.b16 %v410, %v409
        %vm415 = vcmask 261120
        %v417 = vsel %vm415, %v398, 0
        %419 = vmatprep.subr.bf16.mxu0 0
        %420 = vmatpush1.bf16.msra.mxu0 %v411
        %421 = vmatprep.subr.bf16.mxu0 0
        %422 = vmatpush1.bf16.msra.mxu0 %v412
        %423 = vmatprep.subr.bf16.mxu0 0
        %424 = vmatpush1.bf16.msra.mxu0 0
        %425 = vmatprep.subr.bf16.mxu0 0
        %426 = vmatpush1.bf16.msra.mxu0 0
        %427 = vmatprep.subr.bf16.mxu0 0
        %428 = vmatpush1.bf16.msra.mxu0 0
        %429 = vmatprep.subr.bf16.mxu0 0
        %430 = vmatpush1.bf16.msra.mxu0 0
        %431 = vmatprep.subr.bf16.mxu0 0
        %432 = vmatpush1.bf16.msra.mxu0 0
        %433 = vmatprep.subr.bf16.mxu0 0
        %434 = vmatpush1.bf16.msra.mxu0 0
        %435 = vmatprep.subr.bf16.mxu0 0
        %436 = vmatpush1.bf16.msra.mxu0 0
        %437 = vmatprep.subr.bf16.mxu0 0
        %438 = vmatpush1.bf16.msra.mxu0 0
        %439 = vmatprep.subr.bf16.mxu0 0
        %440 = vmatpush1.bf16.msra.mxu0 0
        %441 = vmatprep.subr.bf16.mxu0 0
        %442 = vmatpush1.bf16.msra.mxu0 0
        %443 = vmatprep.subr.bf16.mxu0 0
        %444 = vmatpush1.bf16.msra.mxu0 0
        %445 = vmatprep.subr.bf16.mxu0 0
        %446 = vmatpush1.bf16.msra.mxu0 0
        %447 = vmatprep.subr.bf16.mxu0 0
        %448 = vmatpush1.bf16.msra.mxu0 0
        %449 = vmatprep.subr.bf16.mxu0 0
        %450 = vmatpush1.bf16.msra.mxu0 0
        %451 = vmatprep.mubr.bf16.mxu0 0
        %452 = vmatmul.mubr.bf16.gmra.mrb[0].mxu0 %v417
        %v453 = vpop.f32.mrb[0].mxu0
        %v454 = vadd.f32 0.0, %v453
        %v455 = vpop.f32.mrb[0].mxu0
        %v456 = vpop.f32.mrb[0].mxu0
        %v457 = vadd.f32 0.0, %v456
        %v458 = vpop.f32.mrb[0].mxu0
        %459 = vdwg.mxu0
        %v460 = vld [vmem:[%s379] sm:$0xff]
        %v461 = vld [vmem:[%s379 + $0x8] sm:$0xff]
        %463 = vset.pattern.permute.xlu0 0
        %464 = vperm.xlu0 %463, %v460
        %v465 = vpop.permute.xlu0 %464
        %468 = vset.pattern.permute.xlu0 0
        %469 = vperm.xlu0 %468, %v461
        %v470 = vpop.permute.xlu0 %469
        %v472 = vmul.f32 %v454, %v465
        %v473 = vmul.f32 %v457, %v470
        %v474 = vpack.c.bf16 %v473, %v472
        %v475 = vld [vmem:[%s4] sm:$0xf]
        %v476 = vld [vmem:[%s4 + $0x4] sm:$0x1]
        %v477 = vld [vmem:[%s384] sm:$0xf]
        %v478 = vld [vmem:[%s384 + $0x4] sm:$0xf]
        %v479 = vld [vmem:[%s5] sm:$0xf]
        %v480 = vld [vmem:[%s5 + $0x4] sm:$0x3]
        %v483 = vunpack.c.l.b16 %v477
        %v484 = vunpack.c.l.b16 %v478
        %v485 = vpack.c.b16 %v484, %v483
        %v488 = vunpack.c.l.b16 %v479
        %v489 = vunpack.c.l.b16 %v480
        %v490 = vpack.c.b16 %v489, %v488
        %vm491 = vcmask 97280
        %v493 = vsel %vm491, %v485, 0
        %vm495 = vcmask 1045504
        %v497 = vsel %vm495, %v490, 0
        %499 = vmatprep.subr.bf16.mxu0 0
        %500 = vmatpush1.bf16.msra.mxu0 %v497
        %501 = vmatprep.subr.bf16.mxu0 0
        %502 = vmatpush1.bf16.msra.mxu0 0
        %503 = vmatprep.subr.bf16.mxu0 0
        %504 = vmatpush1.bf16.msra.mxu0 0
        %505 = vmatprep.subr.bf16.mxu0 0
        %506 = vmatpush1.bf16.msra.mxu0 0
        %507 = vmatprep.subr.bf16.mxu0 0
        %508 = vmatpush1.bf16.msra.mxu0 0
        %509 = vmatprep.subr.bf16.mxu0 0
        %510 = vmatpush1.bf16.msra.mxu0 0
        %511 = vmatprep.subr.bf16.mxu0 0
        %512 = vmatpush1.bf16.msra.mxu0 0
        %513 = vmatprep.subr.bf16.mxu0 0
        %514 = vmatpush1.bf16.msra.mxu0 0
        %515 = vmatprep.subr.bf16.mxu0 0
        %516 = vmatpush1.bf16.msra.mxu0 0
        %517 = vmatprep.subr.bf16.mxu0 0
        %518 = vmatpush1.bf16.msra.mxu0 0
        %519 = vmatprep.subr.bf16.mxu0 0
        %520 = vmatpush1.bf16.msra.mxu0 0
        %521 = vmatprep.subr.bf16.mxu0 0
        %522 = vmatpush1.bf16.msra.mxu0 0
        %523 = vmatprep.subr.bf16.mxu0 0
        %524 = vmatpush1.bf16.msra.mxu0 0
        %525 = vmatprep.subr.bf16.mxu0 0
        %526 = vmatpush1.bf16.msra.mxu0 0
        %527 = vmatprep.subr.bf16.mxu0 0
        %528 = vmatpush1.bf16.msra.mxu0 0
        %529 = vmatprep.subr.bf16.mxu0 0
        %530 = vmatpush1.bf16.msra.mxu0 0
        %531 = vmatprep.mubr.bf16.mxu0 0
        %532 = vmatmul.mubr.bf16.gmra.mrb[0].mxu0 %v493
        %v533 = vpop.f32.mrb[0].mxu0
        %v534 = vadd.f32 0.0, %v533
        %v535 = vpop.f32.mrb[0].mxu0
        %v536 = vpop.f32.mrb[0].mxu0
        %v537 = vadd.f32 0.0, %v536
        %v538 = vpop.f32.mrb[0].mxu0
        %539 = vdwg.mxu0
        %v542 = vunpack.c.l.b16 %v475
        %v543 = vunpack.c.l.b16 %v476
        %v544 = vpack.c.b16 %v543, %v542
        %vm545 = vcmask 72704
        %v547 = vsel %vm545, %v474, 0
        %vm549 = vcmask 1043456
        %vm550 = vcmask 1044480
        %v551 = vsel %vm549, 4294967295, 65535
        %v552 = vsel %vm550, %v551, 0
        %v554 = vand.u32 %v544, %v552
        %556 = vmatprep.subr.bf16.mxu0 0
        %557 = vmatpush1.bf16.msra.mxu0 %v554
        %558 = vmatprep.subr.bf16.mxu0 0
        %559 = vmatpush1.bf16.msra.mxu0 0
        %560 = vmatprep.subr.bf16.mxu0 0
        %561 = vmatpush1.bf16.msra.mxu0 0
        %562 = vmatprep.subr.bf16.mxu0 0
        %563 = vmatpush1.bf16.msra.mxu0 0
        %564 = vmatprep.subr.bf16.mxu0 0
        %565 = vmatpush1.bf16.msra.mxu0 0
        %566 = vmatprep.subr.bf16.mxu0 0
        %567 = vmatpush1.bf16.msra.mxu0 0
        %568 = vmatprep.subr.bf16.mxu0 0
        %569 = vmatpush1.bf16.msra.mxu0 0
        %570 = vmatprep.subr.bf16.mxu0 0
        %571 = vmatpush1.bf16.msra.mxu0 0
        %572 = vmatprep.subr.bf16.mxu0 0
        %573 = vmatpush1.bf16.msra.mxu0 0
        %574 = vmatprep.subr.bf16.mxu0 0
        %575 = vmatpush1.bf16.msra.mxu0 0
        %576 = vmatprep.subr.bf16.mxu0 0
        %577 = vmatpush1.bf16.msra.mxu0 0
        %578 = vmatprep.subr.bf16.mxu0 0
        %579 = vmatpush1.bf16.msra.mxu0 0
        %580 = vmatprep.subr.bf16.mxu0 0
        %581 = vmatpush1.bf16.msra.mxu0 0
        %582 = vmatprep.subr.bf16.mxu0 0
        %583 = vmatpush1.bf16.msra.mxu0 0
        %584 = vmatprep.subr.bf16.mxu0 0
        %585 = vmatpush1.bf16.msra.mxu0 0
        %586 = vmatprep.subr.bf16.mxu0 0
        %587 = vmatpush1.bf16.msra.mxu0 0
        %588 = vmatprep.mubr.bf16.mxu0 0
        %589 = vmatmul.mubr.bf16.gmra.mrb[0].mxu0 %v547
        %v590 = vpop.f32.mrb[0].mxu0
        %v591 = vadd.f32 %v534, %v590
        %v592 = vpop.f32.mrb[0].mxu0
        %v593 = vpop.f32.mrb[0].mxu0
        %v594 = vadd.f32 %v537, %v593
        %v595 = vpop.f32.mrb[0].mxu0
        %596 = vdwg.mxu0
        %v597 = vld [vmem:[%s6] sm:$0x1]
        %v599 = vlaneseq
        %v600 = vshrl.u32 %v599, 7
        %v601 = vsub.s32 0, %v600
        %v602 = vrot.slane %v597, %v601
        %v604 = vadd.f32 %v591, %v602
        %v605 = vadd.f32 %v594, %v602
        %v606 = vmax.f32 %v604, 0.0
        %v607 = vmax.f32 %v605, 0.0
        %v608 = vld [vmem:[%s7] sm:$0xff]
        %v609 = vld [vmem:[%s7 + $0x8] sm:$0xff]
        %v610 = vld [vmem:[%s7 + $0x10] sm:$0xff]
        %v611 = vld [vmem:[%s7 + $0x18] sm:$0xff]
        %v612 = vld [vmem:[%s8] sm:$0x1]
        %v614 = vlaneseq
        %v615 = vshrl.u32 %v614, 7
        %v616 = vsub.s32 0, %v615
        %v617 = vrot.slane %v612, %v616
        %v620 = vsel %vm415, %v606, 0
        %v623 = vsel %vm415, %v607, 0
        %625 = vmatprep.subr.mxu0 0.0
        %626 = vmatpush1.msra.mxu0 %v608
        %627 = vmatprep.subr.mxu0 0.0
        %628 = vmatpush1.msra.mxu0 %v609
        %629 = vmatprep.subr.mxu0 0.0
        %630 = vmatpush1.msra.mxu0 %v610
        %631 = vmatprep.subr.mxu0 0.0
        %632 = vmatpush1.msra.mxu0 %v611
        %633 = vmatprep.subr.mxu0 0.0
        %634 = vmatpush1.msra.mxu0 0.0
        %635 = vmatprep.subr.mxu0 0.0
        %636 = vmatpush1.msra.mxu0 0.0
        %637 = vmatprep.subr.mxu0 0.0
        %638 = vmatpush1.msra.mxu0 0.0
        %639 = vmatprep.subr.mxu0 0.0
        %640 = vmatpush1.msra.mxu0 0.0
        %641 = vmatprep.subr.mxu0 0.0
        %642 = vmatpush1.msra.mxu0 0.0
        %643 = vmatprep.subr.mxu0 0.0
        %644 = vmatpush1.msra.mxu0 0.0
        %645 = vmatprep.subr.mxu0 0.0
        %646 = vmatpush1.msra.mxu0 0.0
        %647 = vmatprep.subr.mxu0 0.0
        %648 = vmatpush1.msra.mxu0 0.0
        %649 = vmatprep.subr.mxu0 0.0
        %650 = vmatpush1.msra.mxu0 0.0
        %651 = vmatprep.subr.mxu0 0.0
        %652 = vmatpush1.msra.mxu0 0.0
        %653 = vmatprep.subr.mxu0 0.0
        %654 = vmatpush1.msra.mxu0 0.0
        %655 = vmatprep.subr.mxu0 0.0
        %656 = vmatpush1.msra.mxu0 0.0
        %657 = vmatprep.subr.mxu0 0.0
        %658 = vmatpush1.msra.mxu0 0.0
        %659 = vmatprep.subr.mxu0 0.0
        %660 = vmatpush1.msra.mxu0 0.0
        %661 = vmatprep.subr.mxu0 0.0
        %662 = vmatpush1.msra.mxu0 0.0
        %663 = vmatprep.subr.mxu0 0.0
        %664 = vmatpush1.msra.mxu0 0.0
        %665 = vmatprep.subr.mxu0 0.0
        %666 = vmatpush1.msra.mxu0 0.0
        %667 = vmatprep.subr.mxu0 0.0
        %668 = vmatpush1.msra.mxu0 0.0
        %669 = vmatprep.subr.mxu0 0.0
        %670 = vmatpush1.msra.mxu0 0.0
        %671 = vmatprep.subr.mxu0 0.0
        %672 = vmatpush1.msra.mxu0 0.0
        %673 = vmatprep.subr.mxu0 0.0
        %674 = vmatpush1.msra.mxu0 0.0
        %675 = vmatprep.subr.mxu0 0.0
        %676 = vmatpush1.msra.mxu0 0.0
        %677 = vmatprep.subr.mxu0 0.0
        %678 = vmatpush1.msra.mxu0 0.0
        %679 = vmatprep.subr.mxu0 0.0
        %680 = vmatpush1.msra.mxu0 0.0
        %681 = vmatprep.subr.mxu0 0.0
        %682 = vmatpush1.msra.mxu0 0.0
        %683 = vmatprep.subr.mxu0 0.0
        %684 = vmatpush1.msra.mxu0 0.0
        %685 = vmatprep.subr.mxu0 0.0
        %686 = vmatpush1.msra.mxu0 0.0
        %687 = vmatprep.subr.mxu0 0.0
        %688 = vmatpush1.msra.mxu0 0.0
        %689 = vmatprep.mubr.f32.mxu0 0.0
        %690 = vmatmul.mubr.f32.gmra.mrb[0].mxu0 %v620
        %v691 = vpop.f32.mrb[0].mxu0
        %v692 = vadd.f32 %v617, %v691
        %v693 = vpop.f32.mrb[0].mxu0
        %694 = vmatprep.mubr.f32.mxu0 0.0
        %695 = vmatmul.mubr.f32.gmra.mrb[0].mxu0 %v623
        %v696 = vpop.f32.mrb[0].mxu0
        %v697 = vadd.f32 %v617, %v696
        %v698 = vpop.f32.mrb[0].mxu0
        %699 = vdwg.mxu0
        %700 = vst [vmem:[%s366] sm:$0xff] %v692
        %701 = vst [vmem:[%s366 + $0x8] sm:$0xff] %v697
        %s702 = sand.u32 %s240, 1
        %s703 = scalar_lea.sflag [#allocation3], %s702
        %s704 = sand.u32 %s240, 1
        %s705 = smul.addr %s704, 16
        %s706 = scalar_lea.vmem [#allocation2], %s705
        // Predicated region
        $region57: #{tpu_custom_call.1} parent=55 // pred_check
          %p707 = pneg %p250
        $region58: #{tpu_custom_call.1} parent=55 // pred_check_branch
          %709 = sbr.rel (%p707) target = $region60
        $region59: #{tpu_custom_call.1} parent=55 // pred_region
          %s711 = ssub.s32 256, 256
          %712 = vsyncadd %s703, %s711
          %s713 = smul.addr %s23, 2
          %s714 = smul.addr %s713, 128
          %s715 = scalar_lea.hbm %s9, %s714
          %s716 = sshll.u32 %s706, 4
          %s717 = int_to_ptr.vmem [resolvable:$true] %s716
          %722 = dma.vmem_to_hbm [thread:$0]  %s717, 256, %s715, %s703, 128, 128, 8
        $region60: #{tpu_custom_call.1} parent=55 // pred_fallthru
          _
      $region56: #{tpu_custom_call.1} parent=5 // pred_fallthru
        _
      %p723 = scmp.le.s32.totalorder 2, %s18
      // Predicated region
      $region61: #{tpu_custom_call.1} parent=5 // pred_check
        %p724 = pneg %p723
      $region62: #{tpu_custom_call.1} parent=5 // pred_check_branch
        %726 = sbr.rel (%p724) target = $region64
      $region63: #{tpu_custom_call.1} parent=5 // pred_region
        %s727 = ssub.s32 %s18, 2
        // Predicated region
        $region65: #{tpu_custom_call.1} parent=63 // pred_check
          %p728 = pneg %p256
        $region66: #{tpu_custom_call.1} parent=63 // pred_check_branch
          %730 = sbr.rel (%p728) target = $region68
        $region67: #{tpu_custom_call.1} parent=63 // pred_region
          %s731 = sand.u32 %s241, 1
          %s732 = scalar_lea.sflag [#allocation3], %s731
          %s733 = sand.u32 %s241, 1
          %s734 = smul.addr %s733, 16
          %s735 = scalar_lea.vmem [#allocation2], %s734
          %736 = dma.done %s732, 256
        $region68: #{tpu_custom_call.1} parent=63 // pred_fallthru
          _
      $region64: #{tpu_custom_call.1} parent=5 // pred_fallthru
        _
    $region6: #{tpu_custom_call.1} parent=1 // loop_footer
      %s22 = sadd.s32 1, %s18
    $region7: #{tpu_custom_call.1} parent=1 // loop_footer_branch
      %17 = sbr.rel target = $region3
    $region8: #{tpu_custom_call.1} parent=1 // loop_exit
      _
    %737 = vsyncpa [#allocation3], 1
    %s738 = scalar_lea.sflag [#allocation3], 1
    %739 = vsyncpa %s738, 1

</llo_original>
